<compile_context>
chip_gen: v7x
topology: tpu7x:2x2x1
jax: 0.10.0
libtpu: 0.0.40
codegen_flags: <defaults>
</compile_context>

<pallas_src>
import math

import jax
import jax.numpy as jnp
from jax import lax
from jax.experimental import pallas as pl
from jax.experimental.pallas import tpu as pltpu


def _self_attention_kernel(w_ref, x_ref, out_ref):
    """One grid step == `block_batch` independent attention instances.

    w_ref   : (3*emb_dim, input_length)      stacked [Q; K; V], resident across steps
    x_ref   : (Bt, input_length, seq)
    out_ref : (Bt, emb_dim + input_length, seq)
              rows [:emb_dim]  = v @ softmax(q.T @ k)
              rows [emb_dim:]  = x passthrough (fused concat)
    """
    emb_dim = w_ref.shape[0] // 3
    bt = x_ref.shape[0]
    mxu_dt = x_ref.dtype                      # matmul operand dtype (f32 or bf16)

    w = w_ref[...]                            # hoisted: loaded once per grid step

    # Static unroll over the (small) per-step batch; every index below is a
    # Python int, so all slices are clean (8,128)-tile-aligned sublane/lane slices.
    for b in range(bt):
        x = x_ref[b]                                              # (L, S)

        # Fused Q/K/V projection: one MXU matmul instead of three, f32 accumulation.
        qkv = jnp.dot(w, x, preferred_element_type=jnp.float32)   # (3E, S) f32
        q = qkv[0 * emb_dim:1 * emb_dim, :]                       # free sublane slices
        k = qkv[1 * emb_dim:2 * emb_dim, :]
        v = qkv[2 * emb_dim:3 * emb_dim, :]

        # Scores s = q.T @ k without materializing a transpose: contract axis 0 of
        # q with axis 0 of k (MXU transposed-LHS path).
        s = lax.dot_general(q.astype(mxu_dt), k.astype(mxu_dt),
                            (((0,), (0,)), ((), ())),
                            preferred_element_type=jnp.float32)   # (S, S) f32

        # TODO(synk): the reference calls torch.softmax with no dim argument (which
        # would raise in PyTorch); we use the standard attention convention dim=-1.
        m = jnp.max(s, axis=-1, keepdims=True)                    # (S, 1)
        e = jnp.exp(s - m)                                        # (S, S)
        l = jnp.sum(e, axis=-1, keepdims=True)                    # (S, 1)

        # EUP approximate reciprocal + one Newton step (~f32 accuracy, EUP slot is
        # otherwise idle).  Normalization folds into the matmul RHS; the (S,1)
        # broadcast along lanes is layout-native.
        r = pl.reciprocal(l, approx=True)
        r = r * (2.0 - l * r)

        # attn[d, j] = sum_i v[d, i] * e[i, j] / l[i]  (contraction over the query
        # axis, exactly as written in the reference).
        attn = jnp.dot(v.astype(mxu_dt), (e * r).astype(mxu_dt),
                       preferred_element_type=jnp.float32)        # (E, S) f32

        # Fused output: attention rows + x passthrough rows (concat done in-kernel,
        # no extra HBM round trip for x).
        out_ref[b, :emb_dim, :] = attn.astype(out_ref.dtype)
        out_ref[b, emb_dim:, :] = x.astype(out_ref.dtype)


def self_attention(Q, K, V, x, *, block_batch=8, use_bf16_operands=False):
    """x: (input_length, seq) or (batch, input_length, seq).

    Returns concat([v @ probs, x], axis=-2) per instance, matching the (only
    shape-consistent reading of the) reference forward.
    """
    # TODO(synk): reference `torch.cat(torch.matmul(v, probs), x)` is malformed;
    # we implement concat([v @ probs, x], dim=0) per instance.
    squeeze = x.ndim == 2
    xb = x[None] if squeeze else x
    B, L, S = xb.shape
    E = Q.shape[0]
    assert Q.shape == K.shape == V.shape == (E, L)

    # Stack the three projection weights so the kernel does one fused matmul.
    W = jnp.concatenate([Q, K, V], axis=0)                        # (3E, L)

    if use_bf16_operands:
        # Full-rate MXU operands + halved x DMA bytes; f32 accumulation and f32
        # softmax math are kept inside the kernel.  Output dtype becomes bf16.
        W = W.astype(jnp.bfloat16)
        xb = xb.astype(jnp.bfloat16)

    # Pick the per-step batch.  Prefer an even number of grid steps (>= 2) so the
    # "parallel" axis shards across both TensorCores on v7x; harmless on v5e/v6e.
    bt = max(1, min(block_batch, B))
    steps = pl.cdiv(B, bt)
    if steps > 1 and steps % 2 == 1:
        bt = pl.cdiv(B, steps + 1)
        steps = pl.cdiv(B, bt)

    # Pad the batch up to a whole number of blocks (padded instances compute finite
    # garbage -- all-zero x gives a uniform softmax -- and are sliced off below).
    b_pad = steps * bt
    if b_pad != B:
        xb = jnp.pad(xb, ((0, b_pad - B), (0, 0), (0, 0)))

    out = pl.pallas_call(
        _self_attention_kernel,
        out_shape=jax.ShapeDtypeStruct((b_pad, E + L, S), xb.dtype),
        grid=(steps,),
        in_specs=[
            # Weights: same block every step -> stays resident in VMEM.
            pl.BlockSpec((3 * E, L), lambda g: (0, 0)),
            # Per-step batch of inputs.
            pl.BlockSpec((bt, L, S), lambda g: (g, 0, 0)),
        ],
        out_specs=pl.BlockSpec((bt, E + L, S), lambda g: (g, 0, 0)),
        compiler_params=pltpu.CompilerParams(
            dimension_semantics=("parallel",)),                   # v7x: 2-TC sharding
    )(W, xb)

    out = out[:B]
    return out[0] if squeeze else out


def _xavier_uniform(key, shape, dtype=jnp.float32):
    fan_out, fan_in = shape  # matches torch xavier_uniform_ for a 2-D (out, in) tensor
    bound = math.sqrt(6.0 / (fan_in + fan_out))
    return jax.random.uniform(key, shape, dtype, minval=-bound, maxval=bound)


def _reference(Q, K, V, x):
    q = Q @ x
    k = K @ x
    v = V @ x
    probs = jax.nn.softmax(q.T @ k, axis=-1)
    return jnp.concatenate([v @ probs, x], axis=0)


if __name__ == "__main__":
    emb_dim = 32
    input_length = 16
    seq = 128
    batch = 16

    key = jax.random.PRNGKey(0)
    kq, kk, kv, kx, kxb = jax.random.split(key, 5)

    Q = _xavier_uniform(kq, (emb_dim, input_length))
    K = _xavier_uniform(kk, (emb_dim, input_length))
    V = _xavier_uniform(kv, (emb_dim, input_length))

    # Single-instance call (exact module semantics).
    x = jax.random.normal(kx, (input_length, seq), dtype=jnp.float32)
    out = jax.block_until_ready(self_attention(Q, K, V, x))
    ref = _reference(Q, K, V, x)
    assert out.shape == (emb_dim + input_length, seq), out.shape
    assert jnp.allclose(out, ref, atol=1e-4, rtol=1e-4), "single-instance mismatch"

    # Batched call: 16 instances -> 2 grid steps of 8 (even grid keeps both v7x TCs busy).
    xb = jax.random.normal(kxb, (batch, input_length, seq), dtype=jnp.float32)
    outb = jax.block_until_ready(self_attention(Q, K, V, xb))
    refb = jax.vmap(lambda xi: _reference(Q, K, V, xi))(xb)
    assert outb.shape == (batch, emb_dim + input_length, seq), outb.shape
    assert jnp.allclose(outb, refb, atol=1e-4, rtol=1e-4), "batched mismatch"

    # Ragged batch exercises the pad-to-block path (10 -> 2 steps of 8, padded).
    outr = jax.block_until_ready(self_attention(Q, K, V, xb[:10]))
    assert outr.shape == (10, emb_dim + input_length, seq), outr.shape
    assert jnp.allclose(outr, refb[:10], atol=1e-4, rtol=1e-4), "ragged-batch mismatch"

    # bf16-operand / f32-accumulation path: smoke test only (it intentionally trades
    # accuracy vs. the f32 reference, so no tight allclose here).
    outb16 = jax.block_until_ready(
        self_attention(Q, K, V, xb, use_bf16_operands=True))
    assert outb16.shape == (batch, emb_dim + input_length, seq), outb16.shape
    assert bool(jnp.all(jnp.isfinite(outb16.astype(jnp.float32)))), "bf16 non-finite"

    print("KERNEL_OK")
</pallas_src>

<mosaic_0001>
module attributes {stable_mosaic.version = 11 : i64} {
  func.func @_self_attention_kernel(%arg0: i32, %arg1: memref<96x16xf32, #tpu.memory_space<vmem>>, %arg2: memref<1x16x128xf32, #tpu.memory_space<vmem>>, %arg3: memref<1x48x128xf32, #tpu.memory_space<vmem>>) attributes {dimension_semantics = [#tpu.dimension_semantics<parallel>], iteration_bounds = array<i64: 1>, scalar_prefetch = 0 : i64, scratch_operands = 0 : i64, tpu.core_type = #tpu.core_type<tc>, window_params = [{pipeline_mode = #tpu.pipeline_mode<synchronous>, transform_indices = @transform_0, window_bounds = array<i64: 96, 16>}, {transform_indices = @transform_1, window_bounds = array<i64: 1, 16, 128>}, {transform_indices = @transform_2, window_bounds = array<i64: 1, 48, 128>}]} {
    %c0 = arith.constant 0 : index
    %c0_0 = arith.constant 0 : index
    %0 = vector.load %arg1[%c0, %c0_0] : memref<96x16xf32, #tpu.memory_space<vmem>>, vector<96x16xf32>
    %c0_1 = arith.constant 0 : index
    %c0_2 = arith.constant 0 : index
    %c0_3 = arith.constant 0 : index
    %1 = vector.load %arg2[%c0_1, %c0_2, %c0_3] : memref<1x16x128xf32, #tpu.memory_space<vmem>>, vector<1x16x128xf32>
    %2 = vector.shape_cast %1 : vector<1x16x128xf32> to vector<16x128xf32>
    %cst = arith.constant dense<0.000000e+00> : vector<96x128xf32>
    %3 = tpu.matmul %0, %2, %cst {dimension_numbers = #tpu.dot_dimension_numbers<[1], [0], [0], [1], [0, 0, 1, 1], [], []>} : vector<96x16xf32>, vector<16x128xf32>, vector<96x128xf32> -> vector<96x128xf32>
    %4 = vector.extract_strided_slice %3 {offsets = [0, 0], sizes = [32, 128], strides = [1, 1]} : vector<96x128xf32> to vector<32x128xf32>
    %5 = vector.extract_strided_slice %3 {offsets = [32, 0], sizes = [32, 128], strides = [1, 1]} : vector<96x128xf32> to vector<32x128xf32>
    %6 = vector.extract_strided_slice %3 {offsets = [64, 0], sizes = [32, 128], strides = [1, 1]} : vector<96x128xf32> to vector<32x128xf32>
    %cst_4 = arith.constant dense<0.000000e+00> : vector<128x128xf32>
    %7 = tpu.matmul %4, %5, %cst_4 {dimension_numbers = #tpu.dot_dimension_numbers<[0], [0], [1], [1], [0, 1, 1, 1], [], []>} : vector<32x128xf32>, vector<32x128xf32>, vector<128x128xf32> -> vector<128x128xf32>
    %cst_5 = arith.constant dense<0xFF800000> : vector<128xf32>
    %8 = vector.multi_reduction <maximumf>, %7, %cst_5 [1] : vector<128x128xf32> to vector<128xf32>
    %9 = vector.shape_cast %8 : vector<128xf32> to vector<128x1xf32>
    %10 = vector.broadcast %9 : vector<128x1xf32> to vector<128x128xf32>
    %11 = arith.subf %7, %10 : vector<128x128xf32>
    %12 = math.exp %11 : vector<128x128xf32>
    %cst_6 = arith.constant dense<0.000000e+00> : vector<128xf32>
    %13 = vector.multi_reduction <add>, %12, %cst_6 [1] : vector<128x128xf32> to vector<128xf32>
    %14 = vector.shape_cast %13 : vector<128xf32> to vector<128x1xf32>
    %15 = tpu.reciprocal %14 {approx = true} : vector<128x1xf32> -> vector<128x1xf32>
    %16 = arith.mulf %14, %15 : vector<128x1xf32>
    %cst_7 = arith.constant 2.000000e+00 : f32
    %17 = vector.broadcast %cst_7 : f32 to vector<128x1xf32>
    %18 = arith.subf %17, %16 : vector<128x1xf32>
    %19 = arith.mulf %15, %18 : vector<128x1xf32>
    %20 = vector.broadcast %19 : vector<128x1xf32> to vector<128x128xf32>
    %21 = arith.mulf %12, %20 : vector<128x128xf32>
    %cst_8 = arith.constant dense<0.000000e+00> : vector<32x128xf32>
    %22 = tpu.matmul %6, %21, %cst_8 {dimension_numbers = #tpu.dot_dimension_numbers<[1], [0], [0], [1], [0, 0, 1, 1], [], []>} : vector<32x128xf32>, vector<128x128xf32>, vector<32x128xf32> -> vector<32x128xf32>
    %c0_9 = arith.constant 0 : index
    %c0_10 = arith.constant 0 : index
    %c0_11 = arith.constant 0 : index
    %23 = vector.load %arg3[%c0_9, %c0_10, %c0_11] : memref<1x48x128xf32, #tpu.memory_space<vmem>>, vector<1x32x128xf32>
    %24 = vector.shape_cast %23 : vector<1x32x128xf32> to vector<32x128xf32>
    %25 = vector.shape_cast %22 : vector<32x128xf32> to vector<1x32x128xf32>
    tpu.vector_store %arg3[%c0_9, %c0_10, %c0_11], %25 {strides = array<i32>} : memref<1x48x128xf32, #tpu.memory_space<vmem>>, vector<1x32x128xf32>,
    %c0_12 = arith.constant 0 : index
    %c32 = arith.constant 32 : index
    %c0_13 = arith.constant 0 : index
    %26 = vector.load %arg3[%c0_12, %c32, %c0_13] : memref<1x48x128xf32, #tpu.memory_space<vmem>>, vector<1x16x128xf32>
    %27 = vector.shape_cast %26 : vector<1x16x128xf32> to vector<16x128xf32>
    %28 = vector.shape_cast %2 : vector<16x128xf32> to vector<1x16x128xf32>
    tpu.vector_store %arg3[%c0_12, %c32, %c0_13], %28 {strides = array<i32>} : memref<1x48x128xf32, #tpu.memory_space<vmem>>, vector<1x16x128xf32>,
    return
  }
  func.func @transform_0(%arg0: i32) -> (i32, i32) {
    %c0_i32 = arith.constant 0 : i32
    %c0_i32_0 = arith.constant 0 : i32
    %c0_i32_1 = arith.constant 0 : i32
    return %c0_i32, %c0_i32_0 : i32, i32
  }
  func.func @transform_1(%arg0: i32) -> (i32, i32, i32) {
    %c0_i32 = arith.constant 0 : i32
    %c0_i32_0 = arith.constant 0 : i32
    %c0_i32_1 = arith.constant 0 : i32
    return %arg0, %c0_i32, %c0_i32_0 : i32, i32, i32
  }
  func.func @transform_2(%arg0: i32) -> (i32, i32, i32) {
    %c0_i32 = arith.constant 0 : i32
    %c0_i32_0 = arith.constant 0 : i32
    %c0_i32_1 = arith.constant 0 : i32
    return %arg0, %c0_i32, %c0_i32_0 : i32, i32, i32
  }
}

</mosaic_0001>

<llo_original>
// kernel: tpu_custom_call.1
$region0: #{tpu_custom_call.1}
  #allocation0 [shape = 'u32[]', space=smem, size = 0x4, offset = 0x4, fixed_abs, tag = 'smem constant byte address 0x4 - core index']
  #allocation1 [shape = 'u32[144,128]{1,0:T(1,128)}', space=vmem, size = 0x12000, scoped, tag = 'internal scratch']
  %s0 = inlined_call_operand.vmem [shape: f32[96,16], index: 0, kind: input, shape index: {}]
  %s1 = inlined_call_operand.vmem [shape: f32[1,16,128], index: 1, kind: input, shape index: {}]
  %s2 = inlined_call_operand.hbm [shape: f32[1,48,128], index: 2, kind: output, shape index: {}]
  %s3 = sld [smem:[#allocation0]]
  $region18: #{tpu_custom_call.1} parent=0
    _
  %s5 = ssub.s32 1, %s3
  %s6 = scalar_select 0, %s5, %s3
  $region1: #{tpu_custom_call.1} parent=0
    #allocation2 [shape = 'u8[24576]{0}', space=vmem, size = 0x6000, scoped, tag = 'output window, operand 0, single buffered']
    #allocation3 [shape = 's32[1]{0}', space=sflag, size = 0x4, scoped, tag = 'scoped memory for tpu_custom_call.1']
    %7 = vsyncpa [#allocation3], 0
    // Predicated region
    $region2: #{tpu_custom_call.1} parent=1 // pred_check
      _
    $region3: #{tpu_custom_call.1} parent=1 // pred_check_branch
      %9 = sbr.rel (0) target = $region5
    $region4: #{tpu_custom_call.1} parent=1 // pred_region
      _
    $region5: #{tpu_custom_call.1} parent=1 // pred_fallthru
      _
    // Predicated region
    $region6: #{tpu_custom_call.1} parent=1 // pred_check
      _
    $region7: #{tpu_custom_call.1} parent=1 // pred_check_branch
      %11 = sbr.rel (0) target = $region9
    $region8: #{tpu_custom_call.1} parent=1 // pred_region
      _
    $region9: #{tpu_custom_call.1} parent=1 // pred_fallthru
      _
    %v12 = vld [vmem:[%s0] sm:$0xff]
    %v13 = vld [vmem:[%s0 + $0x8] sm:$0xff]
    %v14 = vld [vmem:[%s0 + $0x10] sm:$0xff]
    %v15 = vld [vmem:[%s0 + $0x18] sm:$0xff]
    %v16 = vld [vmem:[%s0 + $0x20] sm:$0xff]
    %v17 = vld [vmem:[%s0 + $0x28] sm:$0xff]
    %v18 = vld [vmem:[%s0 + $0x30] sm:$0xff]
    %v19 = vld [vmem:[%s0 + $0x38] sm:$0xff]
    %v20 = vld [vmem:[%s0 + $0x40] sm:$0xff]
    %v21 = vld [vmem:[%s0 + $0x48] sm:$0xff]
    %v22 = vld [vmem:[%s0 + $0x50] sm:$0xff]
    %v23 = vld [vmem:[%s0 + $0x58] sm:$0xff]
    %v24 = vld [vmem:[%s1] sm:$0xff]
    %v25 = vld [vmem:[%s1 + $0x8] sm:$0xff]
    %vm26 = vcmask 130048
    %v28 = vsel %vm26, %v12, 0
    %v31 = vsel %vm26, %v13, 0
    %v34 = vsel %vm26, %v14, 0
    %v37 = vsel %vm26, %v15, 0
    %v40 = vsel %vm26, %v16, 0
    %v43 = vsel %vm26, %v17, 0
    %v46 = vsel %vm26, %v18, 0
    %v49 = vsel %vm26, %v19, 0
    %v52 = vsel %vm26, %v20, 0
    %v55 = vsel %vm26, %v21, 0
    %v58 = vsel %vm26, %v22, 0
    %v61 = vsel %vm26, %v23, 0
    %63 = vmatprep.subr.mxu0 0.0
    %64 = vmatpush1.msra.mxu0 %v24
    %65 = vmatprep.subr.mxu0 0.0
    %66 = vmatpush1.msra.mxu0 %v25
    %67 = vmatprep.subr.mxu0 0.0
    %68 = vmatpush1.msra.mxu0 0.0
    %69 = vmatprep.subr.mxu0 0.0
    %70 = vmatpush1.msra.mxu0 0.0
    %71 = vmatprep.subr.mxu0 0.0
    %72 = vmatpush1.msra.mxu0 0.0
    %73 = vmatprep.subr.mxu0 0.0
    %74 = vmatpush1.msra.mxu0 0.0
    %75 = vmatprep.subr.mxu0 0.0
    %76 = vmatpush1.msra.mxu0 0.0
    %77 = vmatprep.subr.mxu0 0.0
    %78 = vmatpush1.msra.mxu0 0.0
    %79 = vmatprep.subr.mxu0 0.0
    %80 = vmatpush1.msra.mxu0 0.0
    %81 = vmatprep.subr.mxu0 0.0
    %82 = vmatpush1.msra.mxu0 0.0
    %83 = vmatprep.subr.mxu0 0.0
    %84 = vmatpush1.msra.mxu0 0.0
    %85 = vmatprep.subr.mxu0 0.0
    %86 = vmatpush1.msra.mxu0 0.0
    %87 = vmatprep.subr.mxu0 0.0
    %88 = vmatpush1.msra.mxu0 0.0
    %89 = vmatprep.subr.mxu0 0.0
    %90 = vmatpush1.msra.mxu0 0.0
    %91 = vmatprep.subr.mxu0 0.0
    %92 = vmatpush1.msra.mxu0 0.0
    %93 = vmatprep.subr.mxu0 0.0
    %94 = vmatpush1.msra.mxu0 0.0
    %95 = vmatprep.subr.mxu0 0.0
    %96 = vmatpush1.msra.mxu0 0.0
    %97 = vmatprep.subr.mxu0 0.0
    %98 = vmatpush1.msra.mxu0 0.0
    %99 = vmatprep.subr.mxu0 0.0
    %100 = vmatpush1.msra.mxu0 0.0
    %101 = vmatprep.subr.mxu0 0.0
    %102 = vmatpush1.msra.mxu0 0.0
    %103 = vmatprep.subr.mxu0 0.0
    %104 = vmatpush1.msra.mxu0 0.0
    %105 = vmatprep.subr.mxu0 0.0
    %106 = vmatpush1.msra.mxu0 0.0
    %107 = vmatprep.subr.mxu0 0.0
    %108 = vmatpush1.msra.mxu0 0.0
    %109 = vmatprep.subr.mxu0 0.0
    %110 = vmatpush1.msra.mxu0 0.0
    %111 = vmatprep.subr.mxu0 0.0
    %112 = vmatpush1.msra.mxu0 0.0
    %113 = vmatprep.subr.mxu0 0.0
    %114 = vmatpush1.msra.mxu0 0.0
    %115 = vmatprep.subr.mxu0 0.0
    %116 = vmatpush1.msra.mxu0 0.0
    %117 = vmatprep.subr.mxu0 0.0
    %118 = vmatpush1.msra.mxu0 0.0
    %119 = vmatprep.subr.mxu0 0.0
    %120 = vmatpush1.msra.mxu0 0.0
    %121 = vmatprep.subr.mxu0 0.0
    %122 = vmatpush1.msra.mxu0 0.0
    %123 = vmatprep.subr.mxu0 0.0
    %124 = vmatpush1.msra.mxu0 0.0
    %125 = vmatprep.subr.mxu0 0.0
    %126 = vmatpush1.msra.mxu0 0.0
    %127 = vmatprep.mubr.f32.mxu0 0.0
    %128 = vmatmul.mubr.f32.gmra.mrb[0].mxu0 %v28
    %v129 = vpop.f32.mrb[0].mxu0
    %v130 = vadd.f32 0.0, %v129
    %v131 = vpop.f32.mrb[0].mxu0
    %132 = vmatprep.mubr.f32.mxu0 0.0
    %133 = vmatmul.mubr.f32.gmra.mrb[0].mxu0 %v31
    %v134 = vpop.f32.mrb[0].mxu0
    %v135 = vadd.f32 0.0, %v134
    %v136 = vpop.f32.mrb[0].mxu0
    %137 = vmatprep.mubr.f32.mxu0 0.0
    %138 = vmatmul.mubr.f32.gmra.mrb[0].mxu0 %v34
    %v139 = vpop.f32.mrb[0].mxu0
    %v140 = vadd.f32 0.0, %v139
    %v141 = vpop.f32.mrb[0].mxu0
    %142 = vmatprep.mubr.f32.mxu0 0.0
    %143 = vmatmul.mubr.f32.gmra.mrb[0].mxu0 %v37
    %v144 = vpop.f32.mrb[0].mxu0
    %v145 = vadd.f32 0.0, %v144
    %v146 = vpop.f32.mrb[0].mxu0
    %147 = vmatprep.mubr.f32.mxu0 0.0
    %148 = vmatmul.mubr.f32.gmra.mrb[0].mxu0 %v40
    %v149 = vpop.f32.mrb[0].mxu0
    %v150 = vadd.f32 0.0, %v149
    %v151 = vpop.f32.mrb[0].mxu0
    %152 = vmatprep.mubr.f32.mxu0 0.0
    %153 = vmatmul.mubr.f32.gmra.mrb[0].mxu0 %v43
    %v154 = vpop.f32.mrb[0].mxu0
    %v155 = vadd.f32 0.0, %v154
    %v156 = vpop.f32.mrb[0].mxu0
    %157 = vmatprep.mubr.f32.mxu0 0.0
    %158 = vmatmul.mubr.f32.gmra.mrb[0].mxu0 %v46
    %v159 = vpop.f32.mrb[0].mxu0
    %v160 = vadd.f32 0.0, %v159
    %v161 = vpop.f32.mrb[0].mxu0
    %162 = vmatprep.mubr.f32.mxu0 0.0
    %163 = vmatmul.mubr.f32.gmra.mrb[0].mxu0 %v49
    %v164 = vpop.f32.mrb[0].mxu0
    %v165 = vadd.f32 0.0, %v164
    %v166 = vpop.f32.mrb[0].mxu0
    %167 = vmatprep.mubr.f32.mxu0 0.0
    %168 = vmatmul.mubr.f32.gmra.mrb[0].mxu0 %v52
    %v169 = vpop.f32.mrb[0].mxu0
    %v170 = vadd.f32 0.0, %v169
    %v171 = vpop.f32.mrb[0].mxu0
    %172 = vmatprep.mubr.f32.mxu0 0.0
    %173 = vmatmul.mubr.f32.gmra.mrb[0].mxu0 %v55
    %v174 = vpop.f32.mrb[0].mxu0
    %v175 = vadd.f32 0.0, %v174
    %v176 = vpop.f32.mrb[0].mxu0
    %177 = vmatprep.mubr.f32.mxu0 0.0
    %178 = vmatmul.mubr.f32.gmra.mrb[0].mxu0 %v58
    %v179 = vpop.f32.mrb[0].mxu0
    %v180 = vadd.f32 0.0, %v179
    %v181 = vpop.f32.mrb[0].mxu0
    %182 = vmatprep.mubr.f32.mxu0 0.0
    %183 = vmatmul.mubr.f32.gmra.mrb[0].mxu0 %v61
    %v184 = vpop.f32.mrb[0].mxu0
    %v185 = vadd.f32 0.0, %v184
    %v186 = vpop.f32.mrb[0].mxu0
    %187 = vdwg.mxu0
    %188 = vxpose.xlu0.b32.start [1/16] %v130, 128
    %189 = vxpose.xlu0.b32.cont [2/16] %v135, 128
    %190 = vxpose.xlu0.b32.cont [3/16] %v140, 128
    %191 = vxpose.xlu0.b32.cont [4/16] %v145, 128
    %192 = vxpose.xlu0.b32.cont [5/16] 0.0, 128
    %193 = vxpose.xlu0.b32.cont [6/16] 0.0, 128
    %194 = vxpose.xlu0.b32.cont [7/16] 0.0, 128
    %195 = vxpose.xlu0.b32.cont [8/16] 0.0, 128
    %196 = vxpose.xlu0.b32.cont [9/16] 0.0, 128
    %197 = vxpose.xlu0.b32.cont [10/16] 0.0, 128
    %198 = vxpose.xlu0.b32.cont [11/16] 0.0, 128
    %199 = vxpose.xlu0.b32.cont [12/16] 0.0, 128
    %200 = vxpose.xlu0.b32.cont [13/16] 0.0, 128
    %201 = vxpose.xlu0.b32.cont [14/16] 0.0, 128
    %202 = vxpose.xlu0.b32.cont [15/16] 0.0, 128
    %203 = vxpose.xlu0.b32.end [16/16] 0.0, 128
    %v204 = vpop.trf.xlu0
    %v205 = vpop.trf.xlu0
    %v206 = vpop.trf.xlu0
    %v207 = vpop.trf.xlu0
    %v208 = vpop.trf.xlu0
    %v209 = vpop.trf.xlu0
    %v210 = vpop.trf.xlu0
    %v211 = vpop.trf.xlu0
    %v212 = vpop.trf.xlu0
    %v213 = vpop.trf.xlu0
    %v214 = vpop.trf.xlu0
    %v215 = vpop.trf.xlu0
    %v216 = vpop.trf.xlu0
    %v217 = vpop.trf.xlu0
    %v218 = vpop.trf.xlu0
    %v219 = vpop.trf.xlu0
    %vm220 = vcmask 261120
    %v222 = vsel %vm220, %v204, 0
    %v225 = vsel %vm220, %v205, 0
    %v228 = vsel %vm220, %v206, 0
    %v231 = vsel %vm220, %v207, 0
    %v234 = vsel %vm220, %v208, 0
    %v237 = vsel %vm220, %v209, 0
    %v240 = vsel %vm220, %v210, 0
    %v243 = vsel %vm220, %v211, 0
    %v246 = vsel %vm220, %v212, 0
    %v249 = vsel %vm220, %v213, 0
    %v252 = vsel %vm220, %v214, 0
    %v255 = vsel %vm220, %v215, 0
    %v258 = vsel %vm220, %v216, 0
    %v261 = vsel %vm220, %v217, 0
    %v264 = vsel %vm220, %v218, 0
    %v267 = vsel %vm220, %v219, 0
    %269 = vmatprep.subr.mxu0 0.0
    %270 = vmatpush1.msra.mxu0 %v150
    %271 = vmatprep.subr.mxu0 0.0
    %272 = vmatpush1.msra.mxu0 %v155
    %273 = vmatprep.subr.mxu0 0.0
    %274 = vmatpush1.msra.mxu0 %v160
    %275 = vmatprep.subr.mxu0 0.0
    %276 = vmatpush1.msra.mxu0 %v165
    %277 = vmatprep.subr.mxu0 0.0
    %278 = vmatpush1.msra.mxu0 0.0
    %279 = vmatprep.subr.mxu0 0.0
    %280 = vmatpush1.msra.mxu0 0.0
    %281 = vmatprep.subr.mxu0 0.0
    %282 = vmatpush1.msra.mxu0 0.0
    %283 = vmatprep.subr.mxu0 0.0
    %284 = vmatpush1.msra.mxu0 0.0
    %285 = vmatprep.subr.mxu0 0.0
    %286 = vmatpush1.msra.mxu0 0.0
    %287 = vmatprep.subr.mxu0 0.0
    %288 = vmatpush1.msra.mxu0 0.0
    %289 = vmatprep.subr.mxu0 0.0
    %290 = vmatpush1.msra.mxu0 0.0
    %291 = vmatprep.subr.mxu0 0.0
    %292 = vmatpush1.msra.mxu0 0.0
    %293 = vmatprep.subr.mxu0 0.0
    %294 = vmatpush1.msra.mxu0 0.0
    %295 = vmatprep.subr.mxu0 0.0
    %296 = vmatpush1.msra.mxu0 0.0
    %297 = vmatprep.subr.mxu0 0.0
    %298 = vmatpush1.msra.mxu0 0.0
    %299 = vmatprep.subr.mxu0 0.0
    %300 = vmatpush1.msra.mxu0 0.0
    %301 = vmatprep.subr.mxu0 0.0
    %302 = vmatpush1.msra.mxu0 0.0
    %303 = vmatprep.subr.mxu0 0.0
    %304 = vmatpush1.msra.mxu0 0.0
    %305 = vmatprep.subr.mxu0 0.0
    %306 = vmatpush1.msra.mxu0 0.0
    %307 = vmatprep.subr.mxu0 0.0
    %308 = vmatpush1.msra.mxu0 0.0
    %309 = vmatprep.subr.mxu0 0.0
    %310 = vmatpush1.msra.mxu0 0.0
    %311 = vmatprep.subr.mxu0 0.0
    %312 = vmatpush1.msra.mxu0 0.0
    %313 = vmatprep.subr.mxu0 0.0
    %314 = vmatpush1.msra.mxu0 0.0
    %315 = vmatprep.subr.mxu0 0.0
    %316 = vmatpush1.msra.mxu0 0.0
    %317 = vmatprep.subr.mxu0 0.0
    %318 = vmatpush1.msra.mxu0 0.0
    %319 = vmatprep.subr.mxu0 0.0
    %320 = vmatpush1.msra.mxu0 0.0
    %321 = vmatprep.subr.mxu0 0.0
    %322 = vmatpush1.msra.mxu0 0.0
    %323 = vmatprep.subr.mxu0 0.0
    %324 = vmatpush1.msra.mxu0 0.0
    %325 = vmatprep.subr.mxu0 0.0
    %326 = vmatpush1.msra.mxu0 0.0
    %327 = vmatprep.subr.mxu0 0.0
    %328 = vmatpush1.msra.mxu0 0.0
    %329 = vmatprep.subr.mxu0 0.0
    %330 = vmatpush1.msra.mxu0 0.0
    %331 = vmatprep.subr.mxu0 0.0
    %332 = vmatpush1.msra.mxu0 0.0
    %333 = vmatprep.mubr.f32.mxu0 0.0
    %334 = vmatmul.mubr.f32.gmra.mrb[0].mxu0 %v222
    %v335 = vpop.f32.mrb[0].mxu0
    %v336 = vadd.f32 0.0, %v335
    %v337 = vpop.f32.mrb[0].mxu0
    %338 = vmatprep.mubr.f32.mxu0 0.0
    %339 = vmatmul.mubr.f32.gmra.mrb[0].mxu0 %v225
    %v340 = vpop.f32.mrb[0].mxu0
    %v341 = vadd.f32 0.0, %v340
    %v342 = vpop.f32.mrb[0].mxu0
    %343 = vmatprep.mubr.f32.mxu0 0.0
    %344 = vmatmul.mubr.f32.gmra.mrb[0].mxu0 %v228
    %v345 = vpop.f32.mrb[0].mxu0
    %v346 = vadd.f32 0.0, %v345
    %v347 = vpop.f32.mrb[0].mxu0
    %348 = vmatprep.mubr.f32.mxu0 0.0
    %349 = vmatmul.mubr.f32.gmra.mrb[0].mxu0 %v231
    %v350 = vpop.f32.mrb[0].mxu0
    %v351 = vadd.f32 0.0, %v350
    %v352 = vpop.f32.mrb[0].mxu0
    %353 = vmatprep.mubr.f32.mxu0 0.0
    %354 = vmatmul.mubr.f32.gmra.mrb[0].mxu0 %v234
    %v355 = vpop.f32.mrb[0].mxu0
    %v356 = vadd.f32 0.0, %v355
    %v357 = vpop.f32.mrb[0].mxu0
    %358 = vmatprep.mubr.f32.mxu0 0.0
    %359 = vmatmul.mubr.f32.gmra.mrb[0].mxu0 %v237
    %v360 = vpop.f32.mrb[0].mxu0
    %v361 = vadd.f32 0.0, %v360
    %v362 = vpop.f32.mrb[0].mxu0
    %363 = vmatprep.mubr.f32.mxu0 0.0
    %364 = vmatmul.mubr.f32.gmra.mrb[0].mxu0 %v240
    %v365 = vpop.f32.mrb[0].mxu0
    %v366 = vadd.f32 0.0, %v365
    %v367 = vpop.f32.mrb[0].mxu0
    %368 = vmatprep.mubr.f32.mxu0 0.0
    %369 = vmatmul.mubr.f32.gmra.mrb[0].mxu0 %v243
    %v370 = vpop.f32.mrb[0].mxu0
    %v371 = vadd.f32 0.0, %v370
    %v372 = vpop.f32.mrb[0].mxu0
    %373 = vmatprep.mubr.f32.mxu0 0.0
    %374 = vmatmul.mubr.f32.gmra.mrb[0].mxu0 %v246
    %v375 = vpop.f32.mrb[0].mxu0
    %v376 = vadd.f32 0.0, %v375
    %v377 = vpop.f32.mrb[0].mxu0
    %378 = vmatprep.mubr.f32.mxu0 0.0
    %379 = vmatmul.mubr.f32.gmra.mrb[0].mxu0 %v249
    %v380 = vpop.f32.mrb[0].mxu0
    %v381 = vadd.f32 0.0, %v380
    %v382 = vpop.f32.mrb[0].mxu0
    %383 = vmatprep.mubr.f32.mxu0 0.0
    %384 = vmatmul.mubr.f32.gmra.mrb[0].mxu0 %v252
    %v385 = vpop.f32.mrb[0].mxu0
    %v386 = vadd.f32 0.0, %v385
    %v387 = vpop.f32.mrb[0].mxu0
    %388 = vmatprep.mubr.f32.mxu0 0.0
    %389 = vmatmul.mubr.f32.gmra.mrb[0].mxu0 %v255
    %v390 = vpop.f32.mrb[0].mxu0
    %v391 = vadd.f32 0.0, %v390
    %v392 = vpop.f32.mrb[0].mxu0
    %393 = vmatprep.mubr.f32.mxu0 0.0
    %394 = vmatmul.mubr.f32.gmra.mrb[0].mxu0 %v258
    %v395 = vpop.f32.mrb[0].mxu0
    %v396 = vadd.f32 0.0, %v395
    %v397 = vpop.f32.mrb[0].mxu0
    %398 = vmatprep.mubr.f32.mxu0 0.0
    %399 = vmatmul.mubr.f32.gmra.mrb[0].mxu0 %v261
    %v400 = vpop.f32.mrb[0].mxu0
    %v401 = vadd.f32 0.0, %v400
    %v402 = vpop.f32.mrb[0].mxu0
    %403 = vmatprep.mubr.f32.mxu0 0.0
    %404 = vmatmul.mubr.f32.gmra.mrb[0].mxu0 %v264
    %v405 = vpop.f32.mrb[0].mxu0
    %v406 = vadd.f32 0.0, %v405
    %v407 = vpop.f32.mrb[0].mxu0
    %408 = vmatprep.mubr.f32.mxu0 0.0
    %409 = vmatmul.mubr.f32.gmra.mrb[0].mxu0 %v267
    %v410 = vpop.f32.mrb[0].mxu0
    %v411 = vadd.f32 0.0, %v410
    %v412 = vpop.f32.mrb[0].mxu0
    %413 = vdwg.mxu0
    %414 = vmax.xlane.f32.xlu0 %v336
    %v415 = vpop.xlane.xlu0 %414
    %416 = vmax.xlane.f32.xlu0 %v341
    %v417 = vpop.xlane.xlu0 %416
    %418 = vmax.xlane.f32.xlu0 %v346
    %v419 = vpop.xlane.xlu0 %418
    %420 = vmax.xlane.f32.xlu0 %v351
    %v421 = vpop.xlane.xlu0 %420
    %422 = vmax.xlane.f32.xlu0 %v356
    %v423 = vpop.xlane.xlu0 %422
    %424 = vmax.xlane.f32.xlu0 %v361
    %v425 = vpop.xlane.xlu0 %424
    %426 = vmax.xlane.f32.xlu0 %v366
    %v427 = vpop.xlane.xlu0 %426
    %428 = vmax.xlane.f32.xlu0 %v371
    %v429 = vpop.xlane.xlu0 %428
    %430 = vmax.xlane.f32.xlu0 %v376
    %v431 = vpop.xlane.xlu0 %430
    %432 = vmax.xlane.f32.xlu0 %v381
    %v433 = vpop.xlane.xlu0 %432
    %434 = vmax.xlane.f32.xlu0 %v386
    %v435 = vpop.xlane.xlu0 %434
    %436 = vmax.xlane.f32.xlu0 %v391
    %v437 = vpop.xlane.xlu0 %436
    %438 = vmax.xlane.f32.xlu0 %v396
    %v439 = vpop.xlane.xlu0 %438
    %440 = vmax.xlane.f32.xlu0 %v401
    %v441 = vpop.xlane.xlu0 %440
    %442 = vmax.xlane.f32.xlu0 %v406
    %v443 = vpop.xlane.xlu0 %442
    %444 = vmax.xlane.f32.xlu0 %v411
    %v445 = vpop.xlane.xlu0 %444
    %v446 = vsub.f32 %v336, %v415
    %v447 = vsub.f32 %v341, %v417
    %v448 = vsub.f32 %v346, %v419
    %v449 = vsub.f32 %v351, %v421
    %v450 = vsub.f32 %v356, %v423
    %v451 = vsub.f32 %v361, %v425
    %v452 = vsub.f32 %v366, %v427
    %v453 = vsub.f32 %v371, %v429
    %v454 = vsub.f32 %v376, %v431
    %v455 = vsub.f32 %v381, %v433
    %v456 = vsub.f32 %v386, %v435
    %v457 = vsub.f32 %v391, %v437
    %v458 = vsub.f32 %v396, %v439
    %v459 = vsub.f32 %v401, %v441
    %v460 = vsub.f32 %v406, %v443
    %v461 = vsub.f32 %v411, %v445
    %v462 = vmul.f32 %v446, 1.442695
    %v463 = vpow.pop %v462
    %v464 = vmul.f32 %v447, 1.442695
    %v465 = vpow.pop %v464
    %v466 = vmul.f32 %v448, 1.442695
    %v467 = vpow.pop %v466
    %v468 = vmul.f32 %v449, 1.442695
    %v469 = vpow.pop %v468
    %v470 = vmul.f32 %v450, 1.442695
    %v471 = vpow.pop %v470
    %v472 = vmul.f32 %v451, 1.442695
    %v473 = vpow.pop %v472
    %v474 = vmul.f32 %v452, 1.442695
    %v475 = vpow.pop %v474
    %v476 = vmul.f32 %v453, 1.442695
    %v477 = vpow.pop %v476
    %v478 = vmul.f32 %v454, 1.442695
    %v479 = vpow.pop %v478
    %v480 = vmul.f32 %v455, 1.442695
    %v481 = vpow.pop %v480
    %v482 = vmul.f32 %v456, 1.442695
    %v483 = vpow.pop %v482
    %v484 = vmul.f32 %v457, 1.442695
    %v485 = vpow.pop %v484
    %v486 = vmul.f32 %v458, 1.442695
    %v487 = vpow.pop %v486
    %v488 = vmul.f32 %v459, 1.442695
    %v489 = vpow.pop %v488
    %v490 = vmul.f32 %v460, 1.442695
    %v491 = vpow.pop %v490
    %v492 = vmul.f32 %v461, 1.442695
    %v493 = vpow.pop %v492
    %494 = vadd.xlane.f32.xlu0 %v463
    %v495 = vpop.xlane.xlu0 %494
    %496 = vadd.xlane.f32.xlu0 %v465
    %v497 = vpop.xlane.xlu0 %496
    %498 = vadd.xlane.f32.xlu0 %v467
    %v499 = vpop.xlane.xlu0 %498
    %500 = vadd.xlane.f32.xlu0 %v469
    %v501 = vpop.xlane.xlu0 %500
    %502 = vadd.xlane.f32.xlu0 %v471
    %v503 = vpop.xlane.xlu0 %502
    %504 = vadd.xlane.f32.xlu0 %v473
    %v505 = vpop.xlane.xlu0 %504
    %506 = vadd.xlane.f32.xlu0 %v475
    %v507 = vpop.xlane.xlu0 %506
    %508 = vadd.xlane.f32.xlu0 %v477
    %v509 = vpop.xlane.xlu0 %508
    %510 = vadd.xlane.f32.xlu0 %v479
    %v511 = vpop.xlane.xlu0 %510
    %512 = vadd.xlane.f32.xlu0 %v481
    %v513 = vpop.xlane.xlu0 %512
    %514 = vadd.xlane.f32.xlu0 %v483
    %v515 = vpop.xlane.xlu0 %514
    %516 = vadd.xlane.f32.xlu0 %v485
    %v517 = vpop.xlane.xlu0 %516
    %518 = vadd.xlane.f32.xlu0 %v487
    %v519 = vpop.xlane.xlu0 %518
    %520 = vadd.xlane.f32.xlu0 %v489
    %v521 = vpop.xlane.xlu0 %520
    %522 = vadd.xlane.f32.xlu0 %v491
    %v523 = vpop.xlane.xlu0 %522
    %524 = vadd.xlane.f32.xlu0 %v493
    %v525 = vpop.xlane.xlu0 %524
    %v526 = vrcp.pop %v495
    %v527 = vrcp.pop %v497
    %v528 = vrcp.pop %v499
    %v529 = vrcp.pop %v501
    %v530 = vrcp.pop %v503
    %v531 = vrcp.pop %v505
    %v532 = vrcp.pop %v507
    %v533 = vrcp.pop %v509
    %v534 = vrcp.pop %v511
    %v535 = vrcp.pop %v513
    %v536 = vrcp.pop %v515
    %v537 = vrcp.pop %v517
    %v538 = vrcp.pop %v519
    %v539 = vrcp.pop %v521
    %v540 = vrcp.pop %v523
    %v541 = vrcp.pop %v525
    %v542 = vmul.f32 %v495, %v526
    %v543 = vmul.f32 %v497, %v527
    %v544 = vmul.f32 %v499, %v528
    %v545 = vmul.f32 %v501, %v529
    %v546 = vmul.f32 %v503, %v530
    %v547 = vmul.f32 %v505, %v531
    %v548 = vmul.f32 %v507, %v532
    %v549 = vmul.f32 %v509, %v533
    %v550 = vmul.f32 %v511, %v534
    %v551 = vmul.f32 %v513, %v535
    %v552 = vmul.f32 %v515, %v536
    %v553 = vmul.f32 %v517, %v537
    %v554 = vmul.f32 %v519, %v538
    %v555 = vmul.f32 %v521, %v539
    %v556 = vmul.f32 %v523, %v540
    %v557 = vmul.f32 %v525, %v541
    %v558 = vsub.f32 2.0, %v542
    %v559 = vsub.f32 2.0, %v543
    %v560 = vsub.f32 2.0, %v544
    %v561 = vsub.f32 2.0, %v545
    %v562 = vsub.f32 2.0, %v546
    %v563 = vsub.f32 2.0, %v547
    %v564 = vsub.f32 2.0, %v548
    %v565 = vsub.f32 2.0, %v549
    %v566 = vsub.f32 2.0, %v550
    %v567 = vsub.f32 2.0, %v551
    %v568 = vsub.f32 2.0, %v552
    %v569 = vsub.f32 2.0, %v553
    %v570 = vsub.f32 2.0, %v554
    %v571 = vsub.f32 2.0, %v555
    %v572 = vsub.f32 2.0, %v556
    %v573 = vsub.f32 2.0, %v557
    %v574 = vmul.f32 %v526, %v558
    %v575 = vmul.f32 %v527, %v559
    %v576 = vmul.f32 %v528, %v560
    %v577 = vmul.f32 %v529, %v561
    %v578 = vmul.f32 %v530, %v562
    %v579 = vmul.f32 %v531, %v563
    %v580 = vmul.f32 %v532, %v564
    %v581 = vmul.f32 %v533, %v565
    %v582 = vmul.f32 %v534, %v566
    %v583 = vmul.f32 %v535, %v567
    %v584 = vmul.f32 %v536, %v568
    %v585 = vmul.f32 %v537, %v569
    %v586 = vmul.f32 %v538, %v570
    %v587 = vmul.f32 %v539, %v571
    %v588 = vmul.f32 %v540, %v572
    %v589 = vmul.f32 %v541, %v573
    %v590 = vmul.f32 %v463, %v574
    %v591 = vmul.f32 %v465, %v575
    %v592 = vmul.f32 %v467, %v576
    %v593 = vmul.f32 %v469, %v577
    %v594 = vmul.f32 %v471, %v578
    %v595 = vmul.f32 %v473, %v579
    %v596 = vmul.f32 %v475, %v580
    %v597 = vmul.f32 %v477, %v581
    %v598 = vmul.f32 %v479, %v582
    %v599 = vmul.f32 %v481, %v583
    %v600 = vmul.f32 %v483, %v584
    %v601 = vmul.f32 %v485, %v585
    %v602 = vmul.f32 %v487, %v586
    %v603 = vmul.f32 %v489, %v587
    %v604 = vmul.f32 %v491, %v588
    %v605 = vmul.f32 %v493, %v589
    %606 = vmatprep.subr.mxu0 0.0
    %607 = vmatpush1.msra.mxu0 %v590
    %608 = vmatprep.subr.mxu0 0.0
    %609 = vmatpush1.msra.mxu0 %v591
    %610 = vmatprep.subr.mxu0 0.0
    %611 = vmatpush1.msra.mxu0 %v592
    %612 = vmatprep.subr.mxu0 0.0
    %613 = vmatpush1.msra.mxu0 %v593
    %614 = vmatprep.subr.mxu0 0.0
    %615 = vmatpush1.msra.mxu0 %v594
    %616 = vmatprep.subr.mxu0 0.0
    %617 = vmatpush1.msra.mxu0 %v595
    %618 = vmatprep.subr.mxu0 0.0
    %619 = vmatpush1.msra.mxu0 %v596
    %620 = vmatprep.subr.mxu0 0.0
    %621 = vmatpush1.msra.mxu0 %v597
    %622 = vmatprep.subr.mxu0 0.0
    %623 = vmatpush1.msra.mxu0 %v598
    %624 = vmatprep.subr.mxu0 0.0
    %625 = vmatpush1.msra.mxu0 %v599
    %626 = vmatprep.subr.mxu0 0.0
    %627 = vmatpush1.msra.mxu0 %v600
    %628 = vmatprep.subr.mxu0 0.0
    %629 = vmatpush1.msra.mxu0 %v601
    %630 = vmatprep.subr.mxu0 0.0
    %631 = vmatpush1.msra.mxu0 %v602
    %632 = vmatprep.subr.mxu0 0.0
    %633 = vmatpush1.msra.mxu0 %v603
    %634 = vmatprep.subr.mxu0 0.0
    %635 = vmatpush1.msra.mxu0 %v604
    %636 = vmatprep.subr.mxu0 0.0
    %637 = vmatpush1.msra.mxu0 %v605
    %638 = vmatprep.subr.mxu0 0.0
    %639 = vmatpush1.msra.mxu0 0.0
    %640 = vmatprep.subr.mxu0 0.0
    %641 = vmatpush1.msra.mxu0 0.0
    %642 = vmatprep.subr.mxu0 0.0
    %643 = vmatpush1.msra.mxu0 0.0
    %644 = vmatprep.subr.mxu0 0.0
    %645 = vmatpush1.msra.mxu0 0.0
    %646 = vmatprep.subr.mxu0 0.0
    %647 = vmatpush1.msra.mxu0 0.0
    %648 = vmatprep.subr.mxu0 0.0
    %649 = vmatpush1.msra.mxu0 0.0
    %650 = vmatprep.subr.mxu0 0.0
    %651 = vmatpush1.msra.mxu0 0.0
    %652 = vmatprep.subr.mxu0 0.0
    %653 = vmatpush1.msra.mxu0 0.0
    %654 = vmatprep.subr.mxu0 0.0
    %655 = vmatpush1.msra.mxu0 0.0
    %656 = vmatprep.subr.mxu0 0.0
    %657 = vmatpush1.msra.mxu0 0.0
    %658 = vmatprep.subr.mxu0 0.0
    %659 = vmatpush1.msra.mxu0 0.0
    %660 = vmatprep.subr.mxu0 0.0
    %661 = vmatpush1.msra.mxu0 0.0
    %662 = vmatprep.subr.mxu0 0.0
    %663 = vmatpush1.msra.mxu0 0.0
    %664 = vmatprep.subr.mxu0 0.0
    %665 = vmatpush1.msra.mxu0 0.0
    %666 = vmatprep.subr.mxu0 0.0
    %667 = vmatpush1.msra.mxu0 0.0
    %668 = vmatprep.subr.mxu0 0.0
    %669 = vmatpush1.msra.mxu0 0.0
    %670 = vmatprep.mubr.f32.mxu0 0.0
    %671 = vmatmul.mubr.f32.gmra.mrb[0].mxu0 %v170
    %v672 = vpop.f32.mrb[0].mxu0
    %v673 = vadd.f32 0.0, %v672
    %v674 = vpop.f32.mrb[0].mxu0
    %675 = vmatprep.mubr.f32.mxu0 0.0
    %676 = vmatmul.mubr.f32.gmra.mrb[0].mxu0 %v175
    %v677 = vpop.f32.mrb[0].mxu0
    %v678 = vadd.f32 0.0, %v677
    %v679 = vpop.f32.mrb[0].mxu0
    %680 = vmatprep.mubr.f32.mxu0 0.0
    %681 = vmatmul.mubr.f32.gmra.mrb[0].mxu0 %v180
    %v682 = vpop.f32.mrb[0].mxu0
    %v683 = vadd.f32 0.0, %v682
    %v684 = vpop.f32.mrb[0].mxu0
    %685 = vmatprep.mubr.f32.mxu0 0.0
    %686 = vmatmul.mubr.f32.gmra.mrb[0].mxu0 %v185
    %v687 = vpop.f32.mrb[0].mxu0
    %v688 = vadd.f32 0.0, %v687
    %v689 = vpop.f32.mrb[0].mxu0
    %690 = vdwg.mxu0
    %691 = vst [vmem:[#allocation2] sm:$0xff] %v673
    %692 = vst [vmem:[#allocation2 + $0x8] sm:$0xff] %v678
    %693 = vst [vmem:[#allocation2 + $0x10] sm:$0xff] %v683
    %694 = vst [vmem:[#allocation2 + $0x18] sm:$0xff] %v688
    %695 = vst [vmem:[#allocation2 + $0x20] sm:$0xff] %v24
    %696 = vst [vmem:[#allocation2 + $0x28] sm:$0xff] %v25
    // Predicated region
    $region10: #{tpu_custom_call.1} parent=1 // pred_check
      _
    $region11: #{tpu_custom_call.1} parent=1 // pred_check_branch
      %698 = sbr.rel (0) target = $region13
    $region12: #{tpu_custom_call.1} parent=1 // pred_region
      %s700 = ssub.s32 768, 768
      %701 = vsyncadd [#allocation3], %s700
      %s702 = sshll.u32 [#allocation2], 4
      %s703 = int_to_ptr.vmem [resolvable:$true] %s702
      %708 = dma.vmem_to_hbm [thread:$0]  %s703, 768, %s2, [#allocation3], 128, 128, 8
    $region13: #{tpu_custom_call.1} parent=1 // pred_fallthru
      _
    // Predicated region
    $region14: #{tpu_custom_call.1} parent=1 // pred_check
      _
    $region15: #{tpu_custom_call.1} parent=1 // pred_check_branch
      %710 = sbr.rel (0) target = $region17
    $region16: #{tpu_custom_call.1} parent=1 // pred_region
      %711 = dma.done [#allocation3], 768
    $region17: #{tpu_custom_call.1} parent=1 // pred_fallthru
      _
    %712 = vsyncpa [#allocation3], 1

</llo_original>
